<compile_context>
chip_gen: v6e
topology: v6e:2x2x1
jax: 0.10.0
libtpu: 0.0.40
codegen_flags: <defaults>
</compile_context>

<pallas_src>
import jax
import jax.numpy as jnp
from jax.experimental import pallas as pl
from jax.experimental.pallas import tpu as pltpu


# ----------------------------------------------------------------------------
# Path 1: vocab-resident kernel (full [H, V] weight lives in VMEM).
# ----------------------------------------------------------------------------
def _mlm_resident_kernel(x_ref, w_ref, b_ref, o_ref):
    """x_ref: [tm, H], w_ref: [H, V], b_ref: [1, V], o_ref: [tm, V]."""
    logits = jnp.dot(x_ref[...], w_ref[...], preferred_element_type=jnp.float32)
    logits = logits + b_ref[...].astype(jnp.float32)
    m = jnp.max(logits, axis=-1, keepdims=True)
    shifted = logits - m
    lse = jnp.log(jnp.sum(jnp.exp(shifted), axis=-1, keepdims=True))
    o_ref[...] = (shifted - lse).astype(o_ref.dtype)


# ----------------------------------------------------------------------------
# Path 2: vocab-tiled kernels (weight too large to keep resident).
# ----------------------------------------------------------------------------
def _logits_lse_kernel(x_ref, w_ref, b_ref, logits_ref, lse_ref, m_sc, l_sc):
    """Streams vocab blocks; emits raw logits blocks + per-token logsumexp.

    x_ref: [tm, H], w_ref: [H, tv], b_ref: [1, tv]
    logits_ref: [tm, tv] (per (i, j) block), lse_ref: [tm, 1] (per token tile)
    m_sc / l_sc: [tm, 1] f32 running max / running sum-of-exp (flash-style).
    """
    j = pl.program_id(1)

    blk = jnp.dot(x_ref[...], w_ref[...], preferred_element_type=jnp.float32)
    blk = blk + b_ref[...].astype(jnp.float32)
    logits_ref[...] = blk

    @pl.when(j == 0)
    def _():
        m_sc[...] = jnp.full(m_sc.shape, -jnp.inf, m_sc.dtype)
        l_sc[...] = jnp.zeros(l_sc.shape, l_sc.dtype)

    m_prev = m_sc[...]
    m_new = jnp.maximum(m_prev, jnp.max(blk, axis=-1, keepdims=True))
    l_sc[...] = (l_sc[...] * jnp.exp(m_prev - m_new)
                 + jnp.sum(jnp.exp(blk - m_new), axis=-1, keepdims=True))
    m_sc[...] = m_new

    @pl.when(j == pl.num_programs(1) - 1)
    def _():
        lse_ref[...] = m_sc[...] + jnp.log(l_sc[...])


def _normalize_kernel(logits_ref, lse_ref, o_ref):
    """logits_ref: [tm, tv] f32, lse_ref: [tm, 1] f32, o_ref: [tm, tv]."""
    o_ref[...] = (logits_ref[...] - lse_ref[...]).astype(o_ref.dtype)


# ----------------------------------------------------------------------------
# Wrappers.
# ----------------------------------------------------------------------------
def _pick_tm(n):
    """Largest multiple-of-8 token tile dividing n with >= 2 grid steps."""
    for cand in (512, 256, 128, 64, 32, 16, 8):
        if n % cand == 0 and n // cand >= 2:
            return cand
    return n  # block == full array dim is always legal


def _compiler_params(semantics, est_bytes):
    kwargs = dict(dimension_semantics=semantics)
    if est_bytes > 24 * 1024 * 1024:
        kwargs["vmem_limit_bytes"] = min(int(est_bytes * 3 // 2),
                                         100 * 1024 * 1024)
    return pltpu.CompilerParams(**kwargs)


def _mlm_head_resident(h2, weight_t, bias, out_dtype, tm):
    N, H = h2.shape
    V = weight_t.shape[1]
    in_item = h2.dtype.itemsize
    w_item = weight_t.dtype.itemsize
    out_item = jnp.dtype(out_dtype).itemsize
    est = (2 * tm * H * in_item            # double-buffered token tiles
           + 2 * tm * V * out_item         # double-buffered output tiles
           + 2 * (H * V + V) * w_item      # resident weight + bias (worst case)
           + 2 * tm * V * 4)               # f32 logits intermediate headroom
    return pl.pallas_call(
        _mlm_resident_kernel,
        out_shape=jax.ShapeDtypeStruct((N, V), out_dtype),
        grid_spec=pltpu.PrefetchScalarGridSpec(
            num_scalar_prefetch=0,
            grid=(N // tm,),
            in_specs=[
                pl.BlockSpec((tm, H), lambda i: (i, 0)),   # streamed tokens
                pl.BlockSpec((H, V), lambda i: (0, 0)),    # weight, resident
                pl.BlockSpec((1, V), lambda i: (0, 0)),    # bias, resident
            ],
            out_specs=pl.BlockSpec((tm, V), lambda i: (i, 0)),
        ),
        compiler_params=_compiler_params(("parallel",), est),
    )(h2, weight_t, bias.reshape(1, V))


def _mlm_head_tiled(h2, weight_t, bias, out_dtype, tm, tv):
    N, H = h2.shape
    V = weight_t.shape[1]
    n_vb = (V + tv - 1) // tv
    Vp = n_vb * tv
    if Vp != V:
        # Padded columns get a huge negative bias -> exp underflows to 0, so the
        # logsumexp over real columns is untouched; they are sliced off below.
        weight_t = jnp.pad(weight_t, ((0, 0), (0, Vp - V)))
        bias = jnp.pad(bias, (0, Vp - V), constant_values=-1e30)
    b2 = bias.reshape(1, Vp)
    ntok = N // tm

    in_item = h2.dtype.itemsize
    w_item = weight_t.dtype.itemsize
    est_a = (2 * tm * H * in_item + 2 * (H * tv + tv) * w_item
             + 2 * tm * tv * 4 + 6 * tm * 4)
    logits, lse = pl.pallas_call(
        _logits_lse_kernel,
        out_shape=(jax.ShapeDtypeStruct((N, Vp), jnp.float32),
                   jax.ShapeDtypeStruct((N, 1), jnp.float32)),
        grid_spec=pltpu.PrefetchScalarGridSpec(
            num_scalar_prefetch=0,
            grid=(ntok, n_vb),
            in_specs=[
                pl.BlockSpec((tm, H), lambda i, j: (i, 0)),
                pl.BlockSpec((H, tv), lambda i, j: (0, j)),
                pl.BlockSpec((1, tv), lambda i, j: (0, j)),
            ],
            out_specs=[
                pl.BlockSpec((tm, tv), lambda i, j: (i, j)),
                pl.BlockSpec((tm, 1), lambda i, j: (i, 0)),
            ],
            scratch_shapes=[pltpu.VMEM((tm, 1), jnp.float32),
                            pltpu.VMEM((tm, 1), jnp.float32)],
        ),
        compiler_params=_compiler_params(("parallel", "arbitrary"), est_a),
    )(h2, weight_t, b2)

    out_item = jnp.dtype(out_dtype).itemsize
    est_b = 2 * tm * tv * (4 + out_item) + 2 * tm * 4
    out = pl.pallas_call(
        _normalize_kernel,
        out_shape=jax.ShapeDtypeStruct((N, Vp), out_dtype),
        grid_spec=pltpu.PrefetchScalarGridSpec(
            num_scalar_prefetch=0,
            grid=(ntok, n_vb),
            in_specs=[
                pl.BlockSpec((tm, tv), lambda i, j: (i, j)),
                pl.BlockSpec((tm, 1), lambda i, j: (i, 0)),
            ],
            out_specs=pl.BlockSpec((tm, tv), lambda i, j: (i, j)),
        ),
        compiler_params=_compiler_params(("parallel", "parallel"), est_b),
    )(logits, lse)
    if Vp != V:
        out = out[:, :V]
    return out


def masked_lm_head(h, weight_t, bias, *, tm=None, tv=512, force_tiled=False):
    """mask_lm head of BERTLM.

    h:        [B, S, H] encoder output (f32 or bf16).
    weight_t: [H, V] = torch Linear.weight.T (transposed once at load time).
    bias:     [V]
    returns   [B, S, V] log-probabilities in h.dtype.
    """
    B, S, H = h.shape
    V = weight_t.shape[1]
    N = B * S
    h2 = h.reshape(N, H)          # free, contiguous reshape (no HBM copy)
    out_dtype = h.dtype
    if tm is None:
        tm = _pick_tm(N)

    # Resident path only if the full weight + token/out tiles fit comfortably in
    # scoped VMEM on every chip generation (v7x has 64 MiB physical).
    w_item = weight_t.dtype.itemsize
    resident_bytes = (2 * (H * V + V) * w_item
                      + 2 * tm * H * h.dtype.itemsize
                      + 2 * tm * V * jnp.dtype(out_dtype).itemsize
                      + 2 * tm * V * 4)
    if force_tiled or resident_bytes > 40 * 1024 * 1024:
        out = _mlm_head_tiled(h2, weight_t, bias, out_dtype, tm, tv)
    else:
        out = _mlm_head_resident(h2, weight_t, bias, out_dtype, tm)
    return out.reshape(B, S, V)


def reference(h, weight_t, bias):
    B, S, H = h.shape
    logits = h.reshape(-1, H) @ weight_t + bias
    return jax.nn.log_softmax(logits, axis=-1).reshape(B, S, -1).astype(h.dtype)


if __name__ == "__main__":
    # Config.hidden_size = 256; small stand-in vocab sizes (the real
    # vocab_size = 30000 is handled at scale by the vocab-tiled path).
    B, S, H = 2, 8, 256
    key = jax.random.PRNGKey(0)
    kh, kw1, kb1, kw2, kb2 = jax.random.split(key, 5)

    h = jax.random.normal(kh, (B, S, H), dtype=jnp.float32)
    bound = 1.0 / (H ** 0.5)   # PyTorch-style Linear init U(-1/sqrt(H), 1/sqrt(H))

    # --- Test 1: vocab-resident path (V multiple of 128, weight VMEM-resident).
    V1 = 512
    w1 = jax.random.uniform(kw1, (H, V1), minval=-bound, maxval=bound,
                            dtype=jnp.float32)
    b1 = jax.random.uniform(kb1, (V1,), minval=-bound, maxval=bound,
                            dtype=jnp.float32)
    out1 = jax.block_until_ready(masked_lm_head(h, w1, b1))
    ref1 = reference(h, w1, b1)
    assert out1.shape == (B, S, V1)
    assert bool(jnp.allclose(out1, ref1, atol=1e-4, rtol=1e-4)), (
        f"resident path: max abs err {jnp.max(jnp.abs(out1 - ref1))}")

    # --- Test 2: vocab-tiled path (V not a multiple of 128 -> padded vocab
    #     blocks; exercises the streaming-LSE path used for the real 30k vocab).
    V2 = 640
    w2 = jax.random.uniform(kw2, (H, V2), minval=-bound, maxval=bound,
                            dtype=jnp.float32)
    b2 = jax.random.uniform(kb2, (V2,), minval=-bound, maxval=bound,
                            dtype=jnp.float32)
    out2 = jax.block_until_ready(
        masked_lm_head(h, w2, b2, tv=256, force_tiled=True))
    ref2 = reference(h, w2, b2)
    assert out2.shape == (B, S, V2)
    assert bool(jnp.allclose(out2, ref2, atol=1e-4, rtol=1e-4)), (
        f"tiled path: max abs err {jnp.max(jnp.abs(out2 - ref2))}")

    print("KERNEL_OK")
</pallas_src>

<mosaic_0001>
module attributes {stable_mosaic.version = 11 : i64} {
  func.func @_mlm_resident_kernel(%arg0: i32, %arg1: memref<8x256xf32, #tpu.memory_space<vmem>>, %arg2: memref<256x512xf32, #tpu.memory_space<vmem>>, %arg3: memref<1x512xf32, #tpu.memory_space<vmem>>, %arg4: memref<8x512xf32, #tpu.memory_space<vmem>>) attributes {dimension_semantics = [#tpu.dimension_semantics<parallel>], iteration_bounds = array<i64: 2>, scalar_prefetch = 0 : i64, scratch_operands = 0 : i64, tpu.core_type = #tpu.core_type<tc>, window_params = [{transform_indices = @transform_0, window_bounds = array<i64: 8, 256>}, {pipeline_mode = #tpu.pipeline_mode<synchronous>, transform_indices = @transform_1, window_bounds = array<i64: 256, 512>}, {pipeline_mode = #tpu.pipeline_mode<synchronous>, transform_indices = @transform_2, window_bounds = array<i64: 1, 512>}, {transform_indices = @transform_3, window_bounds = array<i64: 8, 512>}]} {
    %c0 = arith.constant 0 : index
    %c0_0 = arith.constant 0 : index
    %0 = vector.load %arg1[%c0, %c0_0] : memref<8x256xf32, #tpu.memory_space<vmem>>, vector<8x256xf32>
    %c0_1 = arith.constant 0 : index
    %c0_2 = arith.constant 0 : index
    %1 = vector.load %arg2[%c0_1, %c0_2] : memref<256x512xf32, #tpu.memory_space<vmem>>, vector<256x512xf32>
    %cst = arith.constant dense<0.000000e+00> : vector<8x512xf32>
    %2 = tpu.matmul %0, %1, %cst {dimension_numbers = #tpu.dot_dimension_numbers<[1], [0], [0], [1], [0, 0, 1, 1], [], []>} : vector<8x256xf32>, vector<256x512xf32>, vector<8x512xf32> -> vector<8x512xf32>
    %c0_3 = arith.constant 0 : index
    %c0_4 = arith.constant 0 : index
    %3 = vector.load %arg3[%c0_3, %c0_4] : memref<1x512xf32, #tpu.memory_space<vmem>>, vector<1x512xf32>
    %4 = vector.broadcast %3 : vector<1x512xf32> to vector<8x512xf32>
    %5 = arith.addf %2, %4 : vector<8x512xf32>
    %cst_5 = arith.constant dense<0xFF800000> : vector<8xf32>
    %6 = vector.multi_reduction <maximumf>, %5, %cst_5 [1] : vector<8x512xf32> to vector<8xf32>
    %7 = vector.shape_cast %6 : vector<8xf32> to vector<8x1xf32>
    %8 = vector.broadcast %7 : vector<8x1xf32> to vector<8x512xf32>
    %9 = arith.subf %5, %8 : vector<8x512xf32>
    %10 = math.exp %9 : vector<8x512xf32>
    %cst_6 = arith.constant dense<0.000000e+00> : vector<8xf32>
    %11 = vector.multi_reduction <add>, %10, %cst_6 [1] : vector<8x512xf32> to vector<8xf32>
    %12 = vector.shape_cast %11 : vector<8xf32> to vector<8x1xf32>
    %13 = math.log %12 : vector<8x1xf32>
    %14 = vector.broadcast %13 : vector<8x1xf32> to vector<8x512xf32>
    %15 = arith.subf %9, %14 : vector<8x512xf32>
    %c0_7 = arith.constant 0 : index
    %c0_8 = arith.constant 0 : index
    %16 = vector.load %arg4[%c0_7, %c0_8] : memref<8x512xf32, #tpu.memory_space<vmem>>, vector<8x512xf32>
    tpu.vector_store %arg4[%c0_7, %c0_8], %15 {strides = array<i32>} : memref<8x512xf32, #tpu.memory_space<vmem>>, vector<8x512xf32>,
    return
  }
  func.func @transform_0(%arg0: i32) -> (i32, i32) {
    %c0_i32 = arith.constant 0 : i32
    %c0_i32_0 = arith.constant 0 : i32
    return %arg0, %c0_i32 : i32, i32
  }
  func.func @transform_1(%arg0: i32) -> (i32, i32) {
    %c0_i32 = arith.constant 0 : i32
    %c0_i32_0 = arith.constant 0 : i32
    %c0_i32_1 = arith.constant 0 : i32
    return %c0_i32, %c0_i32_0 : i32, i32
  }
  func.func @transform_2(%arg0: i32) -> (i32, i32) {
    %c0_i32 = arith.constant 0 : i32
    %c0_i32_0 = arith.constant 0 : i32
    %c0_i32_1 = arith.constant 0 : i32
    return %c0_i32, %c0_i32_0 : i32, i32
  }
  func.func @transform_3(%arg0: i32) -> (i32, i32) {
    %c0_i32 = arith.constant 0 : i32
    %c0_i32_0 = arith.constant 0 : i32
    return %arg0, %c0_i32 : i32, i32
  }
}

</mosaic_0001>

<llo_original>
// kernel: tpu_custom_call.1
$region0: #{tpu_custom_call.1}
  #allocation0 [shape = 'u32[]', space=smem, size = 0x4, offset = 0x4, fixed_abs, tag = 'smem constant byte address 0x4 - core index']
  #allocation1 [shape = 'u32[144,128]{1,0:T(1,128)}', space=vmem, size = 0x12000, scoped, tag = 'internal scratch']
  %s0 = inlined_call_operand.hbm [shape: f32[16,256], index: 0, kind: input, shape index: {}]
  %s1 = inlined_call_operand.hbm [shape: f32[256,512], index: 1, kind: input, shape index: {}]
  %s2 = inlined_call_operand.hbm [shape: f32[1,512], index: 2, kind: input, shape index: {}]
  %s3 = inlined_call_operand.hbm [shape: f32[16,512], index: 3, kind: output, shape index: {}]
  %s4 = sld [smem:[#allocation0]]
  $region57: #{tpu_custom_call.1} parent=0
    _
  %s6 = ssub.s32 1, %s4
  %s7 = scalar_select 0, %s6, %s4
  $region1: #{tpu_custom_call.1} parent=0
    #allocation2 [shape = 'u8[16384]{0}', space=vmem, size = 0x4000, scoped, tag = 'input window, operand 0']
    #allocation3 [shape = 's32[2]{0}', space=sflag, size = 0x8, scoped, tag = 'scoped memory for tpu_custom_call.1']
    #allocation4 [shape = 's32[2]{0}', space=sflag, size = 0x8, scoped, tag = 'scoped memory for tpu_custom_call.1']
    #allocation5 [shape = 'u8[524288]{0}', space=vmem, size = 0x80000, scoped, tag = 'input window, operand 1, single buffered']
    #allocation6 [shape = 's32[1]{0}', space=sflag, size = 0x4, scoped, tag = 'scoped memory for tpu_custom_call.1']
    #allocation7 [shape = 'u8[2048]{0}', space=vmem, size = 0x800, scoped, tag = 'input window, operand 2, single buffered']
    #allocation8 [shape = 'u8[32768]{0}', space=vmem, size = 0x8000, scoped, tag = 'output window, operand 0']
    %8 = vsyncpa [#allocation3], 0
    %s9 = scalar_lea.sflag [#allocation3], 1
    %10 = vsyncpa %s9, 0
    %11 = vsyncpa [#allocation6], 0
    %12 = vsyncpa [#allocation4], 0
    %s13 = scalar_lea.sflag [#allocation4], 1
    %14 = vsyncpa %s13, 0
    loop: start=0, step=1, limit=4
    $region2: #{tpu_custom_call.1} parent=1 // loop_pre_header
      _
    $region3: #{tpu_custom_call.1} parent=1 // loop_header
      %s16 = sphi 0, %s20
      %p17 = scmp.ge.s32.totalorder %s16, 4
      %s26 = sphi 0, %s28
      %s29 = sphi 0, %s26
      %s30 = sphi 0, %s29
      %s46 = sphi 0, %s30
      %s50 = sphi 0, %s50
      %s52 = sphi 0, %s50
      %s53 = sphi 0, %s52
      %s67 = sphi 0, %s53
      %s71 = sphi 0, %s71
      %s73 = sphi 0, %s71
      %s74 = sphi 0, %s73
      %s88 = sphi 0, %s74
      %s94 = sphi 0, %s96
      %s97 = sphi 0, %s94
      %s98 = sphi 0, %s97
      %s114 = sphi 0, %s98
    $region4: #{tpu_custom_call.1} parent=1 // loop_header_branch
      %19 = sbr.rel (%p17) target = $region8
    $region5: #{tpu_custom_call.1} parent=1 // loop_body
      %s21 = ssub.s32 %s16, 1
      %s22 = ssub.s32 %s16, 2
      %s23 = sadd.s32 %s16, 1
      %s24 = ssub.s32 %s16, %s23
      %p25 = scmp.eq.s32.totalorder %s24, 0
      %s27 = sadd.s32 %s26, 1
      %s28 = scalar_select %p25, %s26, %s27
      %p31 = pneg %p25
      %p32 = scmp.eq.s32.totalorder %s16, 1
      %p33 = por %p31, %p32
      %p34 = scmp.ne.s32.totalorder %s26, %s29
      %p35 = scmp.eq.s32.totalorder %s16, 0
      %p36 = por %p34, %p35
      %p37 = scmp.ne.s32.totalorder %s26, %s29
      %p38 = scmp.eq.s32.totalorder %s21, 1
      %p39 = por %p37, %p38
      %p40 = scmp.ne.s32.totalorder %s29, %s30
      %p41 = scmp.eq.s32.totalorder %s21, 0
      %p42 = por %p40, %p41
      %p43 = scmp.ne.s32.totalorder %s29, %s30
      %p44 = scmp.eq.s32.totalorder %s22, 1
      %p45 = por %p43, %p44
      %p47 = scmp.ne.s32.totalorder %s30, %s46
      %p48 = scmp.eq.s32.totalorder %s22, 0
      %p49 = por %p47, %p48
      %s51 = sadd.s32 %s50, 1
      %p54 = scmp.eq.s32.totalorder %s16, 1
      %p55 = scmp.ne.s32.totalorder %s50, %s52
      %p56 = scmp.eq.s32.totalorder %s16, 0
      %p57 = por %p55, %p56
      %p58 = scmp.ne.s32.totalorder %s50, %s52
      %p59 = scmp.eq.s32.totalorder %s21, 1
      %p60 = por %p58, %p59
      %p61 = scmp.ne.s32.totalorder %s52, %s53
      %p62 = scmp.eq.s32.totalorder %s21, 0
      %p63 = por %p61, %p62
      %p64 = scmp.ne.s32.totalorder %s52, %s53
      %p65 = scmp.eq.s32.totalorder %s22, 1
      %p66 = por %p64, %p65
      %p68 = scmp.ne.s32.totalorder %s53, %s67
      %p69 = scmp.eq.s32.totalorder %s22, 0
      %p70 = por %p68, %p69
      %s72 = sadd.s32 %s71, 1
      %p75 = scmp.eq.s32.totalorder %s16, 1
      %p76 = scmp.ne.s32.totalorder %s71, %s73
      %p77 = scmp.eq.s32.totalorder %s16, 0
      %p78 = por %p76, %p77
      %p79 = scmp.ne.s32.totalorder %s71, %s73
      %p80 = scmp.eq.s32.totalorder %s21, 1
      %p81 = por %p79, %p80
      %p82 = scmp.ne.s32.totalorder %s73, %s74
      %p83 = scmp.eq.s32.totalorder %s21, 0
      %p84 = por %p82, %p83
      %p85 = scmp.ne.s32.totalorder %s73, %s74
      %p86 = scmp.eq.s32.totalorder %s22, 1
      %p87 = por %p85, %p86
      %p89 = scmp.ne.s32.totalorder %s74, %s88
      %p90 = scmp.eq.s32.totalorder %s22, 0
      %p91 = por %p89, %p90
      %s92 = ssub.s32 %s16, %s23
      %p93 = scmp.eq.s32.totalorder %s92, 0
      %s95 = sadd.s32 %s94, 1
      %s96 = scalar_select %p93, %s94, %s95
      %p99 = pneg %p93
      %p100 = scmp.eq.s32.totalorder %s16, 1
      %p101 = por %p99, %p100
      %p102 = scmp.ne.s32.totalorder %s94, %s97
      %p103 = scmp.eq.s32.totalorder %s16, 0
      %p104 = por %p102, %p103
      %p105 = scmp.ne.s32.totalorder %s94, %s97
      %p106 = scmp.eq.s32.totalorder %s21, 1
      %p107 = por %p105, %p106
      %p108 = scmp.ne.s32.totalorder %s97, %s98
      %p109 = scmp.eq.s32.totalorder %s21, 0
      %p110 = por %p108, %p109
      %p111 = scmp.ne.s32.totalorder %s97, %s98
      %p112 = scmp.eq.s32.totalorder %s22, 1
      %p113 = por %p111, %p112
      %p115 = scmp.ne.s32.totalorder %s98, %s114
      %p116 = scmp.eq.s32.totalorder %s22, 0
      %p117 = por %p115, %p116
      %p118 = scmp.le.s32.totalorder 1, %s16
      %p119 = scmp.lt.s32.totalorder %s16, 3
      %p120 = pnand %p118, %p119
      %p121 = pneg %p120
      // Predicated region
      $region9: #{tpu_custom_call.1} parent=5 // pred_check
        _
      $region10: #{tpu_custom_call.1} parent=5 // pred_check_branch
        %123 = sbr.rel (%p120) target = $region12
      $region11: #{tpu_custom_call.1} parent=5 // pred_region
        %s124 = ssub.s32 %s16, 1
        // Predicated region
        $region13: #{tpu_custom_call.1} parent=11 // pred_check
          %p125 = pneg %p63
        $region14: #{tpu_custom_call.1} parent=11 // pred_check_branch
          %127 = sbr.rel (%p125) target = $region16
        $region15: #{tpu_custom_call.1} parent=11 // pred_region
          %s129 = ssub.s32 16384, 16384
          %130 = vsyncadd [#allocation6], %s129
          %s131 = sshll.u32 [#allocation5], 4
          %s132 = int_to_ptr.vmem [resolvable:$true] %s131
          %137 = dma.hbm_to_vmem [thread:$0]  %s1, 16384, %s132, [#allocation6], 512, 512, 32
        $region16: #{tpu_custom_call.1} parent=11 // pred_fallthru
          _
        // Predicated region
        $region17: #{tpu_custom_call.1} parent=11 // pred_check
          %p138 = pneg %p84
        $region18: #{tpu_custom_call.1} parent=11 // pred_check_branch
          %140 = sbr.rel (%p138) target = $region20
        $region19: #{tpu_custom_call.1} parent=11 // pred_region
          %s142 = ssub.s32 64, 64
          %143 = vsyncadd [#allocation6], %s142
          %s145 = sshll.u32 [#allocation7], 4
          %s146 = int_to_ptr.vmem [resolvable:$true] %s145
          %148 = dma.hbm_to_vmem [thread:$0]  %s2, 64, %s146, [#allocation6]
        $region20: #{tpu_custom_call.1} parent=11 // pred_fallthru
          _
      $region12: #{tpu_custom_call.1} parent=5 // pred_fallthru
        _
      %p149 = scmp.lt.s32.totalorder %s16, 2
      // Predicated region
      $region21: #{tpu_custom_call.1} parent=5 // pred_check
        %p150 = pneg %p149
      $region22: #{tpu_custom_call.1} parent=5 // pred_check_branch
        %152 = sbr.rel (%p150) target = $region24
      $region23: #{tpu_custom_call.1} parent=5 // pred_region
        // Predicated region
        $region25: #{tpu_custom_call.1} parent=23 // pred_check
          %p153 = pneg %p36
        $region26: #{tpu_custom_call.1} parent=23 // pred_check_branch
          %155 = sbr.rel (%p153) target = $region28
        $region27: #{tpu_custom_call.1} parent=23 // pred_region
          %s156 = sand.u32 %s26, 1
          %s157 = scalar_lea.sflag [#allocation3], %s156
          %s158 = sand.u32 %s26, 1
          %s159 = smul.addr %s158, 16
          %s160 = scalar_lea.vmem [#allocation2], %s159
          %s162 = ssub.s32 256, 256
          %163 = vsyncadd %s157, %s162
          %s164 = smul.addr %s16, 2
          %s165 = smul.addr %s164, 128
          %s166 = scalar_lea.hbm %s0, %s165
          %s168 = sshll.u32 %s160, 4
          %s169 = int_to_ptr.vmem [resolvable:$true] %s168
          %171 = dma.hbm_to_vmem [thread:$0]  %s166, 256, %s169, %s157
        $region28: #{tpu_custom_call.1} parent=23 // pred_fallthru
          _
      $region24: #{tpu_custom_call.1} parent=5 // pred_fallthru
        _
      %p172 = scmp.le.s32.totalorder 1, %s16
      %p173 = scmp.lt.s32.totalorder %s16, 3
      %p174 = pnand %p172, %p173
      %p175 = pneg %p174
      // Predicated region
      $region29: #{tpu_custom_call.1} parent=5 // pred_check
        _
      $region30: #{tpu_custom_call.1} parent=5 // pred_check_branch
        %177 = sbr.rel (%p174) target = $region32
      $region31: #{tpu_custom_call.1} parent=5 // pred_region
        %s178 = ssub.s32 %s16, 1
        %s179 = sand.u32 %s29, 1
        %s180 = scalar_lea.sflag [#allocation3], %s179
        %s181 = sand.u32 %s29, 1
        %s182 = smul.addr %s181, 16
        %s183 = scalar_lea.vmem [#allocation2], %s182
        // Predicated region
        $region33: #{tpu_custom_call.1} parent=31 // pred_check
          %p184 = pneg %p42
        $region34: #{tpu_custom_call.1} parent=31 // pred_check_branch
          %186 = sbr.rel (%p184) target = $region36
        $region35: #{tpu_custom_call.1} parent=31 // pred_region
          %187 = dma.done %s180, 256
        $region36: #{tpu_custom_call.1} parent=31 // pred_fallthru
          _
        // Predicated region
        $region37: #{tpu_custom_call.1} parent=31 // pred_check
          %p188 = pneg %p63
        $region38: #{tpu_custom_call.1} parent=31 // pred_check_branch
          %190 = sbr.rel (%p188) target = $region40
        $region39: #{tpu_custom_call.1} parent=31 // pred_region
          %191 = dma.done [#allocation6], 16384
        $region40: #{tpu_custom_call.1} parent=31 // pred_fallthru
          _
        // Predicated region
        $region41: #{tpu_custom_call.1} parent=31 // pred_check
          %p192 = pneg %p84
        $region42: #{tpu_custom_call.1} parent=31 // pred_check_branch
          %194 = sbr.rel (%p192) target = $region44
        $region43: #{tpu_custom_call.1} parent=31 // pred_region
          %195 = dma.done [#allocation6], 64
        $region44: #{tpu_custom_call.1} parent=31 // pred_fallthru
          _
        %s196 = sand.u32 %s29, 1
        %s197 = scalar_lea.sflag [#allocation3], %s196
        %s198 = sand.u32 %s29, 1
        %s199 = smul.addr %s198, 16
        %s200 = scalar_lea.vmem [#allocation2], %s199
        %p201 = pneg %p42
        %p202 = pneg %p39
        %p203 = pneg %p63
        %p204 = pneg %p60
        %p205 = pneg %p84
        %p206 = pneg %p81
        %p207 = pneg %p110
        %p208 = pneg %p107
        %s209 = sand.u32 %s97, 1
        %s210 = scalar_lea.sflag [#allocation4], %s209
        %s211 = sand.u32 %s97, 1
        %s212 = smul.addr %s211, 32
        %s213 = scalar_lea.vmem [#allocation8], %s212
        %v214 = vld [vmem:[%s183] sm:$0xff]
        %v215 = vld [vmem:[%s183 + $0x8] sm:$0xff]
        %v216 = vld [vmem:[#allocation5] sm:$0xff]
        %v217 = vld [vmem:[#allocation5 + $0x8] sm:$0xff]
        %v218 = vld [vmem:[#allocation5 + $0x10] sm:$0xff]
        %v219 = vld [vmem:[#allocation5 + $0x18] sm:$0xff]
        %v220 = vld [vmem:[#allocation5 + $0x20] sm:$0xff]
        %v221 = vld [vmem:[#allocation5 + $0x28] sm:$0xff]
        %v222 = vld [vmem:[#allocation5 + $0x30] sm:$0xff]
        %v223 = vld [vmem:[#allocation5 + $0x38] sm:$0xff]
        %v224 = vld [vmem:[#allocation5 + $0x40] sm:$0xff]
        %v225 = vld [vmem:[#allocation5 + $0x48] sm:$0xff]
        %v226 = vld [vmem:[#allocation5 + $0x50] sm:$0xff]
        %v227 = vld [vmem:[#allocation5 + $0x58] sm:$0xff]
        %v228 = vld [vmem:[#allocation5 + $0x60] sm:$0xff]
        %v229 = vld [vmem:[#allocation5 + $0x68] sm:$0xff]
        %v230 = vld [vmem:[#allocation5 + $0x70] sm:$0xff]
        %v231 = vld [vmem:[#allocation5 + $0x78] sm:$0xff]
        %v232 = vld [vmem:[#allocation5 + $0x80] sm:$0xff]
        %v233 = vld [vmem:[#allocation5 + $0x88] sm:$0xff]
        %v234 = vld [vmem:[#allocation5 + $0x90] sm:$0xff]
        %v235 = vld [vmem:[#allocation5 + $0x98] sm:$0xff]
        %v236 = vld [vmem:[#allocation5 + $0xa0] sm:$0xff]
        %v237 = vld [vmem:[#allocation5 + $0xa8] sm:$0xff]
        %v238 = vld [vmem:[#allocation5 + $0xb0] sm:$0xff]
        %v239 = vld [vmem:[#allocation5 + $0xb8] sm:$0xff]
        %v240 = vld [vmem:[#allocation5 + $0xc0] sm:$0xff]
        %v241 = vld [vmem:[#allocation5 + $0xc8] sm:$0xff]
        %v242 = vld [vmem:[#allocation5 + $0xd0] sm:$0xff]
        %v243 = vld [vmem:[#allocation5 + $0xd8] sm:$0xff]
        %v244 = vld [vmem:[#allocation5 + $0xe0] sm:$0xff]
        %v245 = vld [vmem:[#allocation5 + $0xe8] sm:$0xff]
        %v246 = vld [vmem:[#allocation5 + $0xf0] sm:$0xff]
        %v247 = vld [vmem:[#allocation5 + $0xf8] sm:$0xff]
        %v248 = vld [vmem:[#allocation5 + $0x100] sm:$0xff]
        %v249 = vld [vmem:[#allocation5 + $0x108] sm:$0xff]
        %v250 = vld [vmem:[#allocation5 + $0x110] sm:$0xff]
        %v251 = vld [vmem:[#allocation5 + $0x118] sm:$0xff]
        %v252 = vld [vmem:[#allocation5 + $0x120] sm:$0xff]
        %v253 = vld [vmem:[#allocation5 + $0x128] sm:$0xff]
        %v254 = vld [vmem:[#allocation5 + $0x130] sm:$0xff]
        %v255 = vld [vmem:[#allocation5 + $0x138] sm:$0xff]
        %v256 = vld [vmem:[#allocation5 + $0x140] sm:$0xff]
        %v257 = vld [vmem:[#allocation5 + $0x148] sm:$0xff]
        %v258 = vld [vmem:[#allocation5 + $0x150] sm:$0xff]
        %v259 = vld [vmem:[#allocation5 + $0x158] sm:$0xff]
        %v260 = vld [vmem:[#allocation5 + $0x160] sm:$0xff]
        %v261 = vld [vmem:[#allocation5 + $0x168] sm:$0xff]
        %v262 = vld [vmem:[#allocation5 + $0x170] sm:$0xff]
        %v263 = vld [vmem:[#allocation5 + $0x178] sm:$0xff]
        %v264 = vld [vmem:[#allocation5 + $0x180] sm:$0xff]
        %v265 = vld [vmem:[#allocation5 + $0x188] sm:$0xff]
        %v266 = vld [vmem:[#allocation5 + $0x190] sm:$0xff]
        %v267 = vld [vmem:[#allocation5 + $0x198] sm:$0xff]
        %v268 = vld [vmem:[#allocation5 + $0x1a0] sm:$0xff]
        %v269 = vld [vmem:[#allocation5 + $0x1a8] sm:$0xff]
        %v270 = vld [vmem:[#allocation5 + $0x1b0] sm:$0xff]
        %v271 = vld [vmem:[#allocation5 + $0x1b8] sm:$0xff]
        %v272 = vld [vmem:[#allocation5 + $0x1c0] sm:$0xff]
        %v273 = vld [vmem:[#allocation5 + $0x1c8] sm:$0xff]
        %v274 = vld [vmem:[#allocation5 + $0x1d0] sm:$0xff]
        %v275 = vld [vmem:[#allocation5 + $0x1d8] sm:$0xff]
        %v276 = vld [vmem:[#allocation5 + $0x1e0] sm:$0xff]
        %v277 = vld [vmem:[#allocation5 + $0x1e8] sm:$0xff]
        %v278 = vld [vmem:[#allocation5 + $0x1f0] sm:$0xff]
        %v279 = vld [vmem:[#allocation5 + $0x1f8] sm:$0xff]
        %v280 = vld [vmem:[#allocation5 + $0x200] sm:$0xff]
        %v281 = vld [vmem:[#allocation5 + $0x208] sm:$0xff]
        %v282 = vld [vmem:[#allocation5 + $0x210] sm:$0xff]
        %v283 = vld [vmem:[#allocation5 + $0x218] sm:$0xff]
        %v284 = vld [vmem:[#allocation5 + $0x220] sm:$0xff]
        %v285 = vld [vmem:[#allocation5 + $0x228] sm:$0xff]
        %v286 = vld [vmem:[#allocation5 + $0x230] sm:$0xff]
        %v287 = vld [vmem:[#allocation5 + $0x238] sm:$0xff]
        %v288 = vld [vmem:[#allocation5 + $0x240] sm:$0xff]
        %v289 = vld [vmem:[#allocation5 + $0x248] sm:$0xff]
        %v290 = vld [vmem:[#allocation5 + $0x250] sm:$0xff]
        %v291 = vld [vmem:[#allocation5 + $0x258] sm:$0xff]
        %v292 = vld [vmem:[#allocation5 + $0x260] sm:$0xff]
        %v293 = vld [vmem:[#allocation5 + $0x268] sm:$0xff]
        %v294 = vld [vmem:[#allocation5 + $0x270] sm:$0xff]
        %v295 = vld [vmem:[#allocation5 + $0x278] sm:$0xff]
        %v296 = vld [vmem:[#allocation5 + $0x280] sm:$0xff]
        %v297 = vld [vmem:[#allocation5 + $0x288] sm:$0xff]
        %v298 = vld [vmem:[#allocation5 + $0x290] sm:$0xff]
        %v299 = vld [vmem:[#allocation5 + $0x298] sm:$0xff]
        %v300 = vld [vmem:[#allocation5 + $0x2a0] sm:$0xff]
        %v301 = vld [vmem:[#allocation5 + $0x2a8] sm:$0xff]
        %v302 = vld [vmem:[#allocation5 + $0x2b0] sm:$0xff]
        %v303 = vld [vmem:[#allocation5 + $0x2b8] sm:$0xff]
        %v304 = vld [vmem:[#allocation5 + $0x2c0] sm:$0xff]
        %v305 = vld [vmem:[#allocation5 + $0x2c8] sm:$0xff]
        %v306 = vld [vmem:[#allocation5 + $0x2d0] sm:$0xff]
        %v307 = vld [vmem:[#allocation5 + $0x2d8] sm:$0xff]
        %v308 = vld [vmem:[#allocation5 + $0x2e0] sm:$0xff]
        %v309 = vld [vmem:[#allocation5 + $0x2e8] sm:$0xff]
        %v310 = vld [vmem:[#allocation5 + $0x2f0] sm:$0xff]
        %v311 = vld [vmem:[#allocation5 + $0x2f8] sm:$0xff]
        %v312 = vld [vmem:[#allocation5 + $0x300] sm:$0xff]
        %v313 = vld [vmem:[#allocation5 + $0x308] sm:$0xff]
        %v314 = vld [vmem:[#allocation5 + $0x310] sm:$0xff]
        %v315 = vld [vmem:[#allocation5 + $0x318] sm:$0xff]
        %v316 = vld [vmem:[#allocation5 + $0x320] sm:$0xff]
        %v317 = vld [vmem:[#allocation5 + $0x328] sm:$0xff]
        %v318 = vld [vmem:[#allocation5 + $0x330] sm:$0xff]
        %v319 = vld [vmem:[#allocation5 + $0x338] sm:$0xff]
        %v320 = vld [vmem:[#allocation5 + $0x340] sm:$0xff]
        %v321 = vld [vmem:[#allocation5 + $0x348] sm:$0xff]
        %v322 = vld [vmem:[#allocation5 + $0x350] sm:$0xff]
        %v323 = vld [vmem:[#allocation5 + $0x358] sm:$0xff]
        %v324 = vld [vmem:[#allocation5 + $0x360] sm:$0xff]
        %v325 = vld [vmem:[#allocation5 + $0x368] sm:$0xff]
        %v326 = vld [vmem:[#allocation5 + $0x370] sm:$0xff]
        %v327 = vld [vmem:[#allocation5 + $0x378] sm:$0xff]
        %v328 = vld [vmem:[#allocation5 + $0x380] sm:$0xff]
        %v329 = vld [vmem:[#allocation5 + $0x388] sm:$0xff]
        %v330 = vld [vmem:[#allocation5 + $0x390] sm:$0xff]
        %v331 = vld [vmem:[#allocation5 + $0x398] sm:$0xff]
        %v332 = vld [vmem:[#allocation5 + $0x3a0] sm:$0xff]
        %v333 = vld [vmem:[#allocation5 + $0x3a8] sm:$0xff]
        %v334 = vld [vmem:[#allocation5 + $0x3b0] sm:$0xff]
        %v335 = vld [vmem:[#allocation5 + $0x3b8] sm:$0xff]
        %v336 = vld [vmem:[#allocation5 + $0x3c0] sm:$0xff]
        %v337 = vld [vmem:[#allocation5 + $0x3c8] sm:$0xff]
        %v338 = vld [vmem:[#allocation5 + $0x3d0] sm:$0xff]
        %v339 = vld [vmem:[#allocation5 + $0x3d8] sm:$0xff]
        %v340 = vld [vmem:[#allocation5 + $0x3e0] sm:$0xff]
        %v341 = vld [vmem:[#allocation5 + $0x3e8] sm:$0xff]
        %v342 = vld [vmem:[#allocation5 + $0x3f0] sm:$0xff]
        %v343 = vld [vmem:[#allocation5 + $0x3f8] sm:$0xff]
        %v344 = vld [vmem:[#allocation7] sm:$0xf]
        %v346 = vlaneseq
        %v347 = vshrl.u32 %v346, 7
        %v348 = vsub.s32 0, %v347
        %v349 = vrot.slane %v344, %v348
        %v350 = vlaneseq
        %v351 = vshrl.u32 %v350, 7
        %v352 = vsub.s32 1, %v351
        %v353 = vrot.slane %v344, %v352
        %v354 = vlaneseq
        %v355 = vshrl.u32 %v354, 7
        %v356 = vsub.s32 2, %v355
        %v357 = vrot.slane %v344, %v356
        %v358 = vlaneseq
        %v359 = vshrl.u32 %v358, 7
        %v360 = vsub.s32 3, %v359
        %v361 = vrot.slane %v344, %v360
        %366 = vmatprep.subr.mxu0 %v277
        %367 = vmatpush1.msra.mxu0 %v276
        %368 = vmatprep.subr.mxu0 %v273
        %369 = vmatpush1.msra.mxu0 %v272
        %370 = vmatprep.subr.mxu0 %v269
        %371 = vmatpush1.msra.mxu0 %v268
        %372 = vmatprep.subr.mxu0 %v265
        %373 = vmatpush1.msra.mxu0 %v264
        %374 = vmatprep.subr.mxu0 %v261
        %375 = vmatpush1.msra.mxu0 %v260
        %376 = vmatprep.subr.mxu0 %v257
        %377 = vmatpush1.msra.mxu0 %v256
        %378 = vmatprep.subr.mxu0 %v253
        %379 = vmatpush1.msra.mxu0 %v252
        %380 = vmatprep.subr.mxu0 %v249
        %381 = vmatpush1.msra.mxu0 %v248
        %382 = vmatprep.subr.mxu0 %v245
        %383 = vmatpush1.msra.mxu0 %v244
        %384 = vmatprep.subr.mxu0 %v241
        %385 = vmatpush1.msra.mxu0 %v240
        %386 = vmatprep.subr.mxu0 %v237
        %387 = vmatpush1.msra.mxu0 %v236
        %388 = vmatprep.subr.mxu0 %v233
        %389 = vmatpush1.msra.mxu0 %v232
        %390 = vmatprep.subr.mxu0 %v229
        %391 = vmatpush1.msra.mxu0 %v228
        %392 = vmatprep.subr.mxu0 %v225
        %393 = vmatpush1.msra.mxu0 %v224
        %394 = vmatprep.subr.mxu0 %v221
        %395 = vmatpush1.msra.mxu0 %v220
        %396 = vmatprep.subr.mxu0 %v217
        %397 = vmatpush1.msra.mxu0 %v216
        %398 = vmatprep.subr.mxu0 %v341
        %399 = vmatpush2.msra.mxu0 %v340
        %400 = vmatprep.subr.mxu0 %v337
        %401 = vmatpush2.msra.mxu0 %v336
        %402 = vmatprep.subr.mxu0 %v333
        %403 = vmatpush2.msra.mxu0 %v332
        %404 = vmatprep.subr.mxu0 %v329
        %405 = vmatpush2.msra.mxu0 %v328
        %406 = vmatprep.subr.mxu0 %v325
        %407 = vmatpush2.msra.mxu0 %v324
        %408 = vmatprep.subr.mxu0 %v321
        %409 = vmatpush2.msra.mxu0 %v320
        %410 = vmatprep.subr.mxu0 %v317
        %411 = vmatpush2.msra.mxu0 %v316
        %412 = vmatprep.subr.mxu0 %v313
        %413 = vmatpush2.msra.mxu0 %v312
        %414 = vmatprep.subr.mxu0 %v309
        %415 = vmatpush2.msra.mxu0 %v308
        %416 = vmatprep.subr.mxu0 %v305
        %417 = vmatpush2.msra.mxu0 %v304
        %418 = vmatprep.subr.mxu0 %v301
        %419 = vmatpush2.msra.mxu0 %v300
        %420 = vmatprep.subr.mxu0 %v297
        %421 = vmatpush2.msra.mxu0 %v296
        %422 = vmatprep.subr.mxu0 %v293
        %423 = vmatpush2.msra.mxu0 %v292
        %424 = vmatprep.subr.mxu0 %v289
        %425 = vmatpush2.msra.mxu0 %v288
        %426 = vmatprep.subr.mxu0 %v285
        %427 = vmatpush2.msra.mxu0 %v284
        %428 = vmatprep.subr.mxu0 %v281
        %429 = vmatpush2.msra.mxu0 %v280
        %430 = vmatprep.mubr.f32.mxu0 %v215
        %431 = vmatmul.mubr.f32.gmra.mxu0 %v214
        %v432 = vpop.f32.mrf.mxu0
        %v433 = vadd.f32 %v349, %v432
        %v434 = vpop.f32.mrf.mxu0
        %v435 = vadd.f32 %v353, %v434
        %436 = vdwg.mxu0
        %437 = vmatprep.subr.mxu0 %v279
        %438 = vmatpush1.msra.mxu0 %v278
        %439 = vmatprep.subr.mxu0 %v275
        %440 = vmatpush1.msra.mxu0 %v274
        %441 = vmatprep.subr.mxu0 %v271
        %442 = vmatpush1.msra.mxu0 %v270
        %443 = vmatprep.subr.mxu0 %v267
        %444 = vmatpush1.msra.mxu0 %v266
        %445 = vmatprep.subr.mxu0 %v263
        %446 = vmatpush1.msra.mxu0 %v262
        %447 = vmatprep.subr.mxu0 %v259
        %448 = vmatpush1.msra.mxu0 %v258
        %449 = vmatprep.subr.mxu0 %v255
        %450 = vmatpush1.msra.mxu0 %v254
        %451 = vmatprep.subr.mxu0 %v251
        %452 = vmatpush1.msra.mxu0 %v250
        %453 = vmatprep.subr.mxu0 %v247
        %454 = vmatpush1.msra.mxu0 %v246
        %455 = vmatprep.subr.mxu0 %v243
        %456 = vmatpush1.msra.mxu0 %v242
        %457 = vmatprep.subr.mxu0 %v239
        %458 = vmatpush1.msra.mxu0 %v238
        %459 = vmatprep.subr.mxu0 %v235
        %460 = vmatpush1.msra.mxu0 %v234
        %461 = vmatprep.subr.mxu0 %v231
        %462 = vmatpush1.msra.mxu0 %v230
        %463 = vmatprep.subr.mxu0 %v227
        %464 = vmatpush1.msra.mxu0 %v226
        %465 = vmatprep.subr.mxu0 %v223
        %466 = vmatpush1.msra.mxu0 %v222
        %467 = vmatprep.subr.mxu0 %v219
        %468 = vmatpush1.msra.mxu0 %v218
        %469 = vmatprep.subr.mxu0 %v343
        %470 = vmatpush2.msra.mxu0 %v342
        %471 = vmatprep.subr.mxu0 %v339
        %472 = vmatpush2.msra.mxu0 %v338
        %473 = vmatprep.subr.mxu0 %v335
        %474 = vmatpush2.msra.mxu0 %v334
        %475 = vmatprep.subr.mxu0 %v331
        %476 = vmatpush2.msra.mxu0 %v330
        %477 = vmatprep.subr.mxu0 %v327
        %478 = vmatpush2.msra.mxu0 %v326
        %479 = vmatprep.subr.mxu0 %v323
        %480 = vmatpush2.msra.mxu0 %v322
        %481 = vmatprep.subr.mxu0 %v319
        %482 = vmatpush2.msra.mxu0 %v318
        %483 = vmatprep.subr.mxu0 %v315
        %484 = vmatpush2.msra.mxu0 %v314
        %485 = vmatprep.subr.mxu0 %v311
        %486 = vmatpush2.msra.mxu0 %v310
        %487 = vmatprep.subr.mxu0 %v307
        %488 = vmatpush2.msra.mxu0 %v306
        %489 = vmatprep.subr.mxu0 %v303
        %490 = vmatpush2.msra.mxu0 %v302
        %491 = vmatprep.subr.mxu0 %v299
        %492 = vmatpush2.msra.mxu0 %v298
        %493 = vmatprep.subr.mxu0 %v295
        %494 = vmatpush2.msra.mxu0 %v294
        %495 = vmatprep.subr.mxu0 %v291
        %496 = vmatpush2.msra.mxu0 %v290
        %497 = vmatprep.subr.mxu0 %v287
        %498 = vmatpush2.msra.mxu0 %v286
        %499 = vmatprep.subr.mxu0 %v283
        %500 = vmatpush2.msra.mxu0 %v282
        %501 = vmatprep.mubr.f32.mxu0 %v215
        %502 = vmatmul.mubr.f32.gmra.mxu0 %v214
        %v503 = vpop.f32.mrf.mxu0
        %v504 = vadd.f32 %v357, %v503
        %v505 = vpop.f32.mrf.mxu0
        %v506 = vadd.f32 %v361, %v505
        %507 = vdwg.mxu0
        %v508 = vmax.f32 %v433, %v435
        %v509 = vmax.f32 %v504, %v506
        %v510 = vmax.f32 %v508, %v509
        %511 = vmax.xlane.f32.xlu0 %v510
        %v512 = vpop.xlane.xlu0 %511
        %v513 = vsub.f32 %v433, %v512
        %v514 = vsub.f32 %v435, %v512
        %v515 = vsub.f32 %v504, %v512
        %v516 = vsub.f32 %v506, %v512
        %v517 = vmul.f32 %v513, 1.442695
        %v518 = vpow.pop %v517
        %v519 = vmul.f32 %v514, 1.442695
        %v520 = vpow.pop %v519
        %v521 = vmul.f32 %v515, 1.442695
        %v522 = vpow.pop %v521
        %v523 = vmul.f32 %v516, 1.442695
        %v524 = vpow.pop %v523
        %v525 = vadd.f32 %v518, %v520
        %v526 = vadd.f32 %v525, %v522
        %v527 = vadd.f32 %v526, %v524
        %528 = vadd.xlane.f32.xlu0 %v527
        %v529 = vpop.xlane.xlu0 %528
        %v530 = vlog2.pop %v529
        %v531 = vmul.f32 %v530, 0.6931472
        %v532 = vsub.f32 %v513, %v531
        %v533 = vsub.f32 %v514, %v531
        %v534 = vsub.f32 %v515, %v531
        %v535 = vsub.f32 %v516, %v531
        %536 = vst [vmem:[%s213] sm:$0xff] %v532
        %537 = vst [vmem:[%s213 + $0x8] sm:$0xff] %v533
        %538 = vst [vmem:[%s213 + $0x10] sm:$0xff] %v534
        %539 = vst [vmem:[%s213 + $0x18] sm:$0xff] %v535
        %s540 = sand.u32 %s97, 1
        %s541 = scalar_lea.sflag [#allocation4], %s540
        %s542 = sand.u32 %s97, 1
        %s543 = smul.addr %s542, 32
        %s544 = scalar_lea.vmem [#allocation8], %s543
        // Predicated region
        $region45: #{tpu_custom_call.1} parent=31 // pred_check
          %p545 = pneg %p107
        $region46: #{tpu_custom_call.1} parent=31 // pred_check_branch
          %547 = sbr.rel (%p545) target = $region48
        $region47: #{tpu_custom_call.1} parent=31 // pred_region
          %s549 = ssub.s32 512, 512
          %550 = vsyncadd %s541, %s549
          %s551 = smul.addr %s21, 4
          %s552 = smul.addr %s551, 128
          %s553 = scalar_lea.hbm %s3, %s552
          %s555 = sshll.u32 %s544, 4
          %s556 = int_to_ptr.vmem [resolvable:$true] %s555
          %558 = dma.vmem_to_hbm [thread:$0]  %s556, 512, %s553, %s541
        $region48: #{tpu_custom_call.1} parent=31 // pred_fallthru
          _
      $region32: #{tpu_custom_call.1} parent=5 // pred_fallthru
        _
      %p559 = scmp.le.s32.totalorder 2, %s16
      // Predicated region
      $region49: #{tpu_custom_call.1} parent=5 // pred_check
        %p560 = pneg %p559
      $region50: #{tpu_custom_call.1} parent=5 // pred_check_branch
        %562 = sbr.rel (%p560) target = $region52
      $region51: #{tpu_custom_call.1} parent=5 // pred_region
        %s563 = ssub.s32 %s16, 2
        // Predicated region
        $region53: #{tpu_custom_call.1} parent=51 // pred_check
          %p564 = pneg %p113
        $region54: #{tpu_custom_call.1} parent=51 // pred_check_branch
          %566 = sbr.rel (%p564) target = $region56
        $region55: #{tpu_custom_call.1} parent=51 // pred_region
          %s567 = sand.u32 %s98, 1
          %s568 = scalar_lea.sflag [#allocation4], %s567
          %s569 = sand.u32 %s98, 1
          %s570 = smul.addr %s569, 32
          %s571 = scalar_lea.vmem [#allocation8], %s570
          %572 = dma.done %s568, 512
        $region56: #{tpu_custom_call.1} parent=51 // pred_fallthru
          _
      $region52: #{tpu_custom_call.1} parent=5 // pred_fallthru
        _
    $region6: #{tpu_custom_call.1} parent=1 // loop_footer
      %s20 = sadd.s32 1, %s16
    $region7: #{tpu_custom_call.1} parent=1 // loop_footer_branch
      %15 = sbr.rel target = $region3
    $region8: #{tpu_custom_call.1} parent=1 // loop_exit
      _
    %573 = vsyncpa [#allocation3], 1
    %s574 = scalar_lea.sflag [#allocation3], 1
    %575 = vsyncpa %s574, 1
    %576 = vsyncpa [#allocation6], 1
    %577 = vsyncpa [#allocation4], 1
    %s578 = scalar_lea.sflag [#allocation4], 1
    %579 = vsyncpa %s578, 1

</llo_original>
